<compile_context>
chip_gen: v7x
topology: tpu7x:2x2x1
jax: 0.10.0
libtpu: 0.0.40
codegen_flags: <defaults>
</compile_context>

<pallas_src>
import jax
import jax.numpy as jnp
from jax.experimental import pallas as pl
from jax.experimental.pallas import tpu as pltpu

_LANE = 128     # vreg lane width
_SUBLANE = 8    # f32 sublane height

# Max batch columns (lane axis) per tile.  Padded-tile VMEM accounting (f32):
#   x tile   (10, tb) -> 16 * tb * 4 B
#   out tile ( 5, tb) ->  8 * tb * 4 B
# double-buffered: 192 * tb bytes  ->  ~12 MiB at tb = 65536.
_TB_MAX = 65536


def _cdiv(a, b):
    return -(-a // b)


def _round_up(n, m):
    return _cdiv(n, m) * m


def _padded_tile_bytes(rows, cols, itemsize=4):
    """VMEM bytes of one (rows, cols) f32 tile after (8, 128) layout padding."""
    return _round_up(rows, _SUBLANE) * _round_up(cols, _LANE) * itemsize


def _mlp_kernel_fm(x_ref, w1_ref, b1_ref, w2_ref, b2_ref, o_ref):
    """Feature-major fused MLP tile.

    x_ref : (10, tb)   activations, batch on the lane axis
    w1_ref: (10, 10)   net1 weight, torch [out, in] layout
    b1_ref: (10, 1)    net1 bias column (lane-broadcast add)
    w2_ref: (5, 10)    net2 weight, torch [out, in] layout
    b2_ref: (5, 1)     net2 bias column
    o_ref : (5, tb)    lane-dense output tile
    """
    h = jnp.dot(w1_ref[...], x_ref[...], preferred_element_type=jnp.float32)
    h = jnp.maximum(h + b1_ref[...], 0.0)                       # bias + ReLU
    out = jnp.dot(w2_ref[...], h, preferred_element_type=jnp.float32)
    o_ref[...] = (out + b2_ref[...]).astype(o_ref.dtype)


def toy_mp_model_forward_fm(x_fm, w1_oi, b1, w2_oi, b2, *, tb_max=_TB_MAX):
    """Feature-major entry point (preferred: producer supplies this layout).

    x_fm : [10, B] f32 (features x batch)   -> returns [5, B]
    w1_oi: [10, 10] torch-layout [out, in];  b1: [10]
    w2_oi: [5, 10]  torch-layout [out, in];  b2: [5]
    """
    in_features, B = x_fm.shape
    hidden = w1_oi.shape[0]
    out_features = w2_oi.shape[0]

    # Biases as [N, 1] columns -> broadcast across the lane (batch) axis.
    b1_col = b1.reshape(hidden, 1)
    b2_col = b2.reshape(out_features, 1)

    # Near-equal lane tiles; pad B only to lane granularity.
    tb_cap = max(_round_up(int(tb_max), _LANE), _LANE)
    n_tiles = _cdiv(B, tb_cap)
    tb = _round_up(_cdiv(B, n_tiles), _LANE)
    B_pad = n_tiles * tb
    if B_pad != B:
        x_fm = jnp.pad(x_fm, ((0, 0), (0, B_pad - B)))

    # Explicit scoped-VMEM budget from (8,128)-padded tile bytes:
    # double-buffered activations/outputs + resident (tiny) weights + headroom.
    vmem_need = 2 * (_padded_tile_bytes(in_features, tb)
                     + _padded_tile_bytes(out_features, tb))
    vmem_need += 2 * (_padded_tile_bytes(hidden, in_features)
                      + _padded_tile_bytes(hidden, 1)
                      + _padded_tile_bytes(out_features, hidden)
                      + _padded_tile_bytes(out_features, 1))
    vmem_limit = int(vmem_need + (4 << 20))

    cost = pl.CostEstimate(
        flops=2 * B_pad * (in_features * hidden + hidden * out_features),
        transcendentals=0,
        bytes_accessed=4 * (B_pad * (in_features + out_features)
                            + hidden * in_features + hidden
                            + out_features * hidden + out_features),
    )

    out_fm = pl.pallas_call(
        _mlp_kernel_fm,
        out_shape=jax.ShapeDtypeStruct((out_features, B_pad), x_fm.dtype),
        grid_spec=pltpu.PrefetchScalarGridSpec(
            num_scalar_prefetch=0,
            grid=(n_tiles,),
            in_specs=[
                # Activations: tiled along the lane (batch) axis -> pipelined
                # double-buffered HBM<->VMEM DMA.
                pl.BlockSpec((in_features, tb), lambda i: (0, i)),
                # Weights / biases: constant block index -> VMEM-resident.
                pl.BlockSpec((hidden, in_features), lambda i: (0, 0)),
                pl.BlockSpec((hidden, 1), lambda i: (0, 0)),
                pl.BlockSpec((out_features, hidden), lambda i: (0, 0)),
                pl.BlockSpec((out_features, 1), lambda i: (0, 0)),
            ],
            out_specs=pl.BlockSpec((out_features, tb), lambda i: (0, i)),
        ),
        compiler_params=pltpu.CompilerParams(
            # Batch tiles are independent.  NOTE: "parallel" alone does NOT
            # engage v7x's second TensorCore.
            # TODO(synk): for v7x, split a leading size-2 grid axis and mark it
            # pltpu.CORE_PARALLEL (or pl.core_map over
            # pltpu.create_tensorcore_mesh) if both TCs are wanted; the win is
            # modest since this kernel is HBM-roofline-bound.
            dimension_semantics=("parallel",),
            vmem_limit_bytes=vmem_limit,
        ),
        cost_estimate=cost,
    )(x_fm, w1_oi, b1_col, w2_oi, b2_col)

    return out_fm[:, :B] if B_pad != B else out_fm


def toy_mp_model_forward(x, w1, b1, w2, b2, *, tb_max=_TB_MAX):
    """Module-layout wrapper matching the torch forward.

    x: [B, 10]; w1: [10, 10] ([in, out]); b1: [10]; w2: [10, 5]; b2: [5]
    Returns relu(x @ w1 + b1) @ w2 + b2 with shape [B, 5].

    The boundary transposes are layout plumbing only.
    # TODO(synk): in a real model, have the producer supply feature-major x
    # ([10, B]) and consume [5, B] directly via toy_mp_model_forward_fm to
    # avoid these extra HBM round-trips.
    """
    out_fm = toy_mp_model_forward_fm(x.T, w1.T, b1, w2.T, b2, tb_max=tb_max)
    return out_fm.T


def _init_linear(key, in_features, out_features, dtype=jnp.float32):
    """Deterministic init mirroring torch.nn.Linear (uniform +/- 1/sqrt(in))."""
    k_w, k_b = jax.random.split(key)
    bound = 1.0 / jnp.sqrt(jnp.asarray(in_features, dtype))
    # Stored [in, out] so the pure-JAX reference is x @ W + b.
    w = jax.random.uniform(k_w, (in_features, out_features), dtype,
                           minval=-bound, maxval=bound)
    b = jax.random.uniform(k_b, (out_features,), dtype,
                           minval=-bound, maxval=bound)
    return w, b


if __name__ == "__main__":
    key = jax.random.PRNGKey(0)
    k_x, k_x2, k_l1, k_l2 = jax.random.split(key, 4)

    # net1: Linear(10, 10); net2: Linear(10, 5)
    w1, b1 = _init_linear(k_l1, 10, 10)
    w2, b2 = _init_linear(k_l2, 10, 5)

    # 1) Module-layout path ([B, 10] in, [B, 5] out), small batch.
    B = 8
    x = jax.random.normal(k_x, (B, 10), jnp.float32)
    out = jax.block_until_ready(toy_mp_model_forward(x, w1, b1, w2, b2))
    ref = jnp.maximum(x @ w1 + b1, 0.0) @ w2 + b2
    assert out.shape == (B, 5)
    assert jnp.allclose(out, ref, atol=1e-5, rtol=1e-5)

    # 2) Feature-major producer path: exercises a multi-step grid (3 tiles of
    #    256 lanes) plus ragged-remainder lane padding on the last tile.
    B2 = 600
    x2 = jax.random.normal(k_x2, (B2, 10), jnp.float32)
    out2_fm = jax.block_until_ready(
        toy_mp_model_forward_fm(x2.T, w1.T, b1, w2.T, b2, tb_max=256))
    ref2 = jnp.maximum(x2 @ w1 + b1, 0.0) @ w2 + b2
    assert out2_fm.shape == (5, B2)
    assert jnp.allclose(out2_fm.T, ref2, atol=1e-5, rtol=1e-5)

    print("KERNEL_OK")
</pallas_src>

<mosaic_0001>
module attributes {stable_mosaic.version = 11 : i64} {
  func.func @_mlp_kernel_fm(%arg0: i32, %arg1: memref<10x128xf32, #tpu.memory_space<vmem>>, %arg2: memref<10x10xf32, #tpu.memory_space<vmem>>, %arg3: memref<10x1xf32, #tpu.memory_space<vmem>>, %arg4: memref<5x10xf32, #tpu.memory_space<vmem>>, %arg5: memref<5x1xf32, #tpu.memory_space<vmem>>, %arg6: memref<5x128xf32, #tpu.memory_space<vmem>>) attributes {dimension_semantics = [#tpu.dimension_semantics<parallel>], iteration_bounds = array<i64: 1>, scalar_prefetch = 0 : i64, scratch_operands = 0 : i64, tpu.core_type = #tpu.core_type<tc>, window_params = [{transform_indices = @transform_0, window_bounds = array<i64: 10, 128>}, {pipeline_mode = #tpu.pipeline_mode<synchronous>, transform_indices = @transform_1, window_bounds = array<i64: 10, 10>}, {pipeline_mode = #tpu.pipeline_mode<synchronous>, transform_indices = @transform_2, window_bounds = array<i64: 10, 1>}, {pipeline_mode = #tpu.pipeline_mode<synchronous>, transform_indices = @transform_3, window_bounds = array<i64: 5, 10>}, {pipeline_mode = #tpu.pipeline_mode<synchronous>, transform_indices = @transform_4, window_bounds = array<i64: 5, 1>}, {transform_indices = @transform_5, window_bounds = array<i64: 5, 128>}]} {
    %c0 = arith.constant 0 : index
    %c0_0 = arith.constant 0 : index
    %0 = vector.load %arg2[%c0, %c0_0] : memref<10x10xf32, #tpu.memory_space<vmem>>, vector<10x10xf32>
    %c0_1 = arith.constant 0 : index
    %c0_2 = arith.constant 0 : index
    %1 = vector.load %arg1[%c0_1, %c0_2] : memref<10x128xf32, #tpu.memory_space<vmem>>, vector<10x128xf32>
    %cst = arith.constant dense<0.000000e+00> : vector<10x128xf32>
    %2 = tpu.matmul %0, %1, %cst {dimension_numbers = #tpu.dot_dimension_numbers<[1], [0], [0], [1], [0, 0, 1, 1], [], []>} : vector<10x10xf32>, vector<10x128xf32>, vector<10x128xf32> -> vector<10x128xf32>
    %c0_3 = arith.constant 0 : index
    %c0_4 = arith.constant 0 : index
    %3 = vector.load %arg3[%c0_3, %c0_4] : memref<10x1xf32, #tpu.memory_space<vmem>>, vector<10x1xf32>
    %4 = vector.broadcast %3 : vector<10x1xf32> to vector<10x128xf32>
    %5 = arith.addf %2, %4 : vector<10x128xf32>
    %cst_5 = arith.constant 0.000000e+00 : f32
    %6 = vector.broadcast %cst_5 : f32 to vector<10x128xf32>
    %7 = arith.maximumf %5, %6 : vector<10x128xf32>
    %c0_6 = arith.constant 0 : index
    %c0_7 = arith.constant 0 : index
    %8 = vector.load %arg4[%c0_6, %c0_7] : memref<5x10xf32, #tpu.memory_space<vmem>>, vector<5x10xf32>
    %cst_8 = arith.constant dense<0.000000e+00> : vector<5x128xf32>
    %9 = tpu.matmul %8, %7, %cst_8 {dimension_numbers = #tpu.dot_dimension_numbers<[1], [0], [0], [1], [0, 0, 1, 1], [], []>} : vector<5x10xf32>, vector<10x128xf32>, vector<5x128xf32> -> vector<5x128xf32>
    %c0_9 = arith.constant 0 : index
    %c0_10 = arith.constant 0 : index
    %10 = vector.load %arg5[%c0_9, %c0_10] : memref<5x1xf32, #tpu.memory_space<vmem>>, vector<5x1xf32>
    %11 = vector.broadcast %10 : vector<5x1xf32> to vector<5x128xf32>
    %12 = arith.addf %9, %11 : vector<5x128xf32>
    %c0_11 = arith.constant 0 : index
    %c0_12 = arith.constant 0 : index
    %13 = vector.load %arg6[%c0_11, %c0_12] : memref<5x128xf32, #tpu.memory_space<vmem>>, vector<5x128xf32>
    tpu.vector_store %arg6[%c0_11, %c0_12], %12 {strides = array<i32>} : memref<5x128xf32, #tpu.memory_space<vmem>>, vector<5x128xf32>,
    return
  }
  func.func @transform_0(%arg0: i32) -> (i32, i32) {
    %c0_i32 = arith.constant 0 : i32
    %c0_i32_0 = arith.constant 0 : i32
    return %c0_i32, %arg0 : i32, i32
  }
  func.func @transform_1(%arg0: i32) -> (i32, i32) {
    %c0_i32 = arith.constant 0 : i32
    %c0_i32_0 = arith.constant 0 : i32
    %c0_i32_1 = arith.constant 0 : i32
    return %c0_i32, %c0_i32_0 : i32, i32
  }
  func.func @transform_2(%arg0: i32) -> (i32, i32) {
    %c0_i32 = arith.constant 0 : i32
    %c0_i32_0 = arith.constant 0 : i32
    %c0_i32_1 = arith.constant 0 : i32
    return %c0_i32, %c0_i32_0 : i32, i32
  }
  func.func @transform_3(%arg0: i32) -> (i32, i32) {
    %c0_i32 = arith.constant 0 : i32
    %c0_i32_0 = arith.constant 0 : i32
    %c0_i32_1 = arith.constant 0 : i32
    return %c0_i32, %c0_i32_0 : i32, i32
  }
  func.func @transform_4(%arg0: i32) -> (i32, i32) {
    %c0_i32 = arith.constant 0 : i32
    %c0_i32_0 = arith.constant 0 : i32
    %c0_i32_1 = arith.constant 0 : i32
    return %c0_i32, %c0_i32_0 : i32, i32
  }
  func.func @transform_5(%arg0: i32) -> (i32, i32) {
    %c0_i32 = arith.constant 0 : i32
    %c0_i32_0 = arith.constant 0 : i32
    return %c0_i32, %arg0 : i32, i32
  }
}

</mosaic_0001>

<llo_original>
// kernel: tpu_custom_call.1
$region0: #{tpu_custom_call.1}
  #allocation0 [shape = 'u32[]', space=smem, size = 0x4, offset = 0x4, fixed_abs, tag = 'smem constant byte address 0x4 - core index']
  #allocation1 [shape = 'u32[144,128]{1,0:T(1,128)}', space=vmem, size = 0x12000, scoped, tag = 'internal scratch']
  %s0 = inlined_call_operand.vmem [shape: f32[10,128], index: 0, kind: input, shape index: {}]
  %s1 = inlined_call_operand.hbm [shape: f32[10,10], index: 1, kind: input, shape index: {}]
  %s2 = inlined_call_operand.vmem [shape: f32[10,1], index: 2, kind: input, shape index: {}]
  %s3 = inlined_call_operand.vmem [shape: f32[5,10], index: 3, kind: input, shape index: {}]
  %s4 = inlined_call_operand.vmem [shape: f32[5,1], index: 4, kind: input, shape index: {}]
  %s5 = inlined_call_operand.hbm [shape: f32[5,128], index: 5, kind: output, shape index: {}]
  %s6 = sld [smem:[#allocation0]]
  $region34: #{tpu_custom_call.1} parent=0
    _
  %s8 = ssub.s32 1, %s6
  %s9 = scalar_select 0, %s8, %s6
  $region1: #{tpu_custom_call.1} parent=0
    #allocation2 [shape = 'u8[8192]{0}', space=vmem, size = 0x2000, scoped, tag = 'input window, operand 1, single buffered']
    #allocation3 [shape = 's32[1]{0}', space=sflag, size = 0x4, scoped, tag = 'scoped memory for tpu_custom_call.1']
    #allocation4 [shape = 's32[1]{0}', space=sflag, size = 0x4, scoped, tag = 'scoped memory for tpu_custom_call.1']
    #allocation5 [shape = 'u8[4096]{0}', space=vmem, size = 0x1000, scoped, tag = 'output window, operand 0, single buffered']
    %10 = vsyncpa [#allocation3], 0
    %11 = vsyncpa [#allocation4], 0
    // Predicated region
    $region2: #{tpu_custom_call.1} parent=1 // pred_check
      _
    $region3: #{tpu_custom_call.1} parent=1 // pred_check_branch
      %13 = sbr.rel (0) target = $region5
    $region4: #{tpu_custom_call.1} parent=1 // pred_region
      _
    $region5: #{tpu_custom_call.1} parent=1 // pred_fallthru
      _
    // Predicated region
    $region6: #{tpu_custom_call.1} parent=1 // pred_check
      _
    $region7: #{tpu_custom_call.1} parent=1 // pred_check_branch
      %15 = sbr.rel (0) target = $region9
    $region8: #{tpu_custom_call.1} parent=1 // pred_region
      %s17 = ssub.s32 256, 256
      %18 = vsyncadd [#allocation3], %s17
      %s19 = sshll.u32 [#allocation2], 4
      %s20 = int_to_ptr.vmem [resolvable:$true] %s19
      %25 = dma.hbm_to_vmem [thread:$0]  %s1, 256, %s20, [#allocation3], 128, 128, 8
    $region9: #{tpu_custom_call.1} parent=1 // pred_fallthru
      _
    // Predicated region
    $region10: #{tpu_custom_call.1} parent=1 // pred_check
      _
    $region11: #{tpu_custom_call.1} parent=1 // pred_check_branch
      %27 = sbr.rel (0) target = $region13
    $region12: #{tpu_custom_call.1} parent=1 // pred_region
      _
    $region13: #{tpu_custom_call.1} parent=1 // pred_fallthru
      _
    // Predicated region
    $region14: #{tpu_custom_call.1} parent=1 // pred_check
      _
    $region15: #{tpu_custom_call.1} parent=1 // pred_check_branch
      %29 = sbr.rel (0) target = $region17
    $region16: #{tpu_custom_call.1} parent=1 // pred_region
      _
    $region17: #{tpu_custom_call.1} parent=1 // pred_fallthru
      _
    // Predicated region
    $region18: #{tpu_custom_call.1} parent=1 // pred_check
      _
    $region19: #{tpu_custom_call.1} parent=1 // pred_check_branch
      %31 = sbr.rel (0) target = $region21
    $region20: #{tpu_custom_call.1} parent=1 // pred_region
      _
    $region21: #{tpu_custom_call.1} parent=1 // pred_fallthru
      _
    // Predicated region
    $region22: #{tpu_custom_call.1} parent=1 // pred_check
      _
    $region23: #{tpu_custom_call.1} parent=1 // pred_check_branch
      %33 = sbr.rel (0) target = $region25
    $region24: #{tpu_custom_call.1} parent=1 // pred_region
      %34 = dma.done [#allocation3], 256
    $region25: #{tpu_custom_call.1} parent=1 // pred_fallthru
      _
    %v35 = vld [vmem:[#allocation2] sm:$0xff]
    %v36 = vld [vmem:[#allocation2 + $0x8] sm:$0x3]
    %v37 = vld [vmem:[%s0] sm:$0xff]
    %v38 = vld [vmem:[%s0 + $0x8] sm:$0x3]
    %v39 = vld [vmem:[%s2] sm:$0xff]
    %v40 = vld [vmem:[%s2 + $0x8] sm:$0x3]
    %42 = vset.pattern.permute.xlu0 0
    %43 = vperm.xlu0 %42, %v39
    %v44 = vpop.permute.xlu0 %43
    %47 = vset.pattern.permute.xlu0 0
    %48 = vperm.xlu0 %47, %v40
    %v49 = vpop.permute.xlu0 %48
    %vm51 = vcmask 80896
    %v53 = vsel %vm51, %v35, 0
    %v56 = vsel %vm51, %v36, 0
    %vm58 = vcmask 1041408
    %v60 = vsel %vm58, %v38, 0
    %62 = vmatprep.subr.mxu0 0.0
    %63 = vmatpush1.msra.mxu0 %v37
    %64 = vmatprep.subr.mxu0 0.0
    %65 = vmatpush1.msra.mxu0 %v60
    %66 = vmatprep.subr.mxu0 0.0
    %67 = vmatpush1.msra.mxu0 0.0
    %68 = vmatprep.subr.mxu0 0.0
    %69 = vmatpush1.msra.mxu0 0.0
    %70 = vmatprep.subr.mxu0 0.0
    %71 = vmatpush1.msra.mxu0 0.0
    %72 = vmatprep.subr.mxu0 0.0
    %73 = vmatpush1.msra.mxu0 0.0
    %74 = vmatprep.subr.mxu0 0.0
    %75 = vmatpush1.msra.mxu0 0.0
    %76 = vmatprep.subr.mxu0 0.0
    %77 = vmatpush1.msra.mxu0 0.0
    %78 = vmatprep.subr.mxu0 0.0
    %79 = vmatpush1.msra.mxu0 0.0
    %80 = vmatprep.subr.mxu0 0.0
    %81 = vmatpush1.msra.mxu0 0.0
    %82 = vmatprep.subr.mxu0 0.0
    %83 = vmatpush1.msra.mxu0 0.0
    %84 = vmatprep.subr.mxu0 0.0
    %85 = vmatpush1.msra.mxu0 0.0
    %86 = vmatprep.subr.mxu0 0.0
    %87 = vmatpush1.msra.mxu0 0.0
    %88 = vmatprep.subr.mxu0 0.0
    %89 = vmatpush1.msra.mxu0 0.0
    %90 = vmatprep.subr.mxu0 0.0
    %91 = vmatpush1.msra.mxu0 0.0
    %92 = vmatprep.subr.mxu0 0.0
    %93 = vmatpush1.msra.mxu0 0.0
    %94 = vmatprep.subr.mxu0 0.0
    %95 = vmatpush1.msra.mxu0 0.0
    %96 = vmatprep.subr.mxu0 0.0
    %97 = vmatpush1.msra.mxu0 0.0
    %98 = vmatprep.subr.mxu0 0.0
    %99 = vmatpush1.msra.mxu0 0.0
    %100 = vmatprep.subr.mxu0 0.0
    %101 = vmatpush1.msra.mxu0 0.0
    %102 = vmatprep.subr.mxu0 0.0
    %103 = vmatpush1.msra.mxu0 0.0
    %104 = vmatprep.subr.mxu0 0.0
    %105 = vmatpush1.msra.mxu0 0.0
    %106 = vmatprep.subr.mxu0 0.0
    %107 = vmatpush1.msra.mxu0 0.0
    %108 = vmatprep.subr.mxu0 0.0
    %109 = vmatpush1.msra.mxu0 0.0
    %110 = vmatprep.subr.mxu0 0.0
    %111 = vmatpush1.msra.mxu0 0.0
    %112 = vmatprep.subr.mxu0 0.0
    %113 = vmatpush1.msra.mxu0 0.0
    %114 = vmatprep.subr.mxu0 0.0
    %115 = vmatpush1.msra.mxu0 0.0
    %116 = vmatprep.subr.mxu0 0.0
    %117 = vmatpush1.msra.mxu0 0.0
    %118 = vmatprep.subr.mxu0 0.0
    %119 = vmatpush1.msra.mxu0 0.0
    %120 = vmatprep.subr.mxu0 0.0
    %121 = vmatpush1.msra.mxu0 0.0
    %122 = vmatprep.subr.mxu0 0.0
    %123 = vmatpush1.msra.mxu0 0.0
    %124 = vmatprep.subr.mxu0 0.0
    %125 = vmatpush1.msra.mxu0 0.0
    %126 = vmatprep.mubr.f32.mxu0 0.0
    %127 = vmatmul.mubr.f32.gmra.mrb[0].mxu0 %v53
    %v128 = vpop.f32.mrb[0].mxu0
    %v129 = vadd.f32 %v44, %v128
    %v130 = vpop.f32.mrb[0].mxu0
    %131 = vmatprep.mubr.f32.mxu0 0.0
    %132 = vmatmul.mubr.f32.gmra.mrb[0].mxu0 %v56
    %v133 = vpop.f32.mrb[0].mxu0
    %v134 = vadd.f32 %v49, %v133
    %v135 = vpop.f32.mrb[0].mxu0
    %136 = vdwg.mxu0
    %v137 = vmax.f32 %v129, 0.0
    %v138 = vmax.f32 %v134, 0.0
    %v139 = vld [vmem:[%s3] sm:$0x1f]
    %v140 = vld [vmem:[%s4] sm:$0x1f]
    %142 = vset.pattern.permute.xlu0 0
    %143 = vperm.xlu0 %142, %v140
    %v144 = vpop.permute.xlu0 %143
    %v147 = vsel %vm51, %v139, 0
    %v150 = vsel %vm58, %v138, 0
    %152 = vmatprep.subr.mxu0 0.0
    %153 = vmatpush1.msra.mxu0 %v137
    %154 = vmatprep.subr.mxu0 0.0
    %155 = vmatpush1.msra.mxu0 %v150
    %156 = vmatprep.subr.mxu0 0.0
    %157 = vmatpush1.msra.mxu0 0.0
    %158 = vmatprep.subr.mxu0 0.0
    %159 = vmatpush1.msra.mxu0 0.0
    %160 = vmatprep.subr.mxu0 0.0
    %161 = vmatpush1.msra.mxu0 0.0
    %162 = vmatprep.subr.mxu0 0.0
    %163 = vmatpush1.msra.mxu0 0.0
    %164 = vmatprep.subr.mxu0 0.0
    %165 = vmatpush1.msra.mxu0 0.0
    %166 = vmatprep.subr.mxu0 0.0
    %167 = vmatpush1.msra.mxu0 0.0
    %168 = vmatprep.subr.mxu0 0.0
    %169 = vmatpush1.msra.mxu0 0.0
    %170 = vmatprep.subr.mxu0 0.0
    %171 = vmatpush1.msra.mxu0 0.0
    %172 = vmatprep.subr.mxu0 0.0
    %173 = vmatpush1.msra.mxu0 0.0
    %174 = vmatprep.subr.mxu0 0.0
    %175 = vmatpush1.msra.mxu0 0.0
    %176 = vmatprep.subr.mxu0 0.0
    %177 = vmatpush1.msra.mxu0 0.0
    %178 = vmatprep.subr.mxu0 0.0
    %179 = vmatpush1.msra.mxu0 0.0
    %180 = vmatprep.subr.mxu0 0.0
    %181 = vmatpush1.msra.mxu0 0.0
    %182 = vmatprep.subr.mxu0 0.0
    %183 = vmatpush1.msra.mxu0 0.0
    %184 = vmatprep.subr.mxu0 0.0
    %185 = vmatpush1.msra.mxu0 0.0
    %186 = vmatprep.subr.mxu0 0.0
    %187 = vmatpush1.msra.mxu0 0.0
    %188 = vmatprep.subr.mxu0 0.0
    %189 = vmatpush1.msra.mxu0 0.0
    %190 = vmatprep.subr.mxu0 0.0
    %191 = vmatpush1.msra.mxu0 0.0
    %192 = vmatprep.subr.mxu0 0.0
    %193 = vmatpush1.msra.mxu0 0.0
    %194 = vmatprep.subr.mxu0 0.0
    %195 = vmatpush1.msra.mxu0 0.0
    %196 = vmatprep.subr.mxu0 0.0
    %197 = vmatpush1.msra.mxu0 0.0
    %198 = vmatprep.subr.mxu0 0.0
    %199 = vmatpush1.msra.mxu0 0.0
    %200 = vmatprep.subr.mxu0 0.0
    %201 = vmatpush1.msra.mxu0 0.0
    %202 = vmatprep.subr.mxu0 0.0
    %203 = vmatpush1.msra.mxu0 0.0
    %204 = vmatprep.subr.mxu0 0.0
    %205 = vmatpush1.msra.mxu0 0.0
    %206 = vmatprep.subr.mxu0 0.0
    %207 = vmatpush1.msra.mxu0 0.0
    %208 = vmatprep.subr.mxu0 0.0
    %209 = vmatpush1.msra.mxu0 0.0
    %210 = vmatprep.subr.mxu0 0.0
    %211 = vmatpush1.msra.mxu0 0.0
    %212 = vmatprep.subr.mxu0 0.0
    %213 = vmatpush1.msra.mxu0 0.0
    %214 = vmatprep.subr.mxu0 0.0
    %215 = vmatpush1.msra.mxu0 0.0
    %216 = vmatprep.mubr.f32.mxu0 0.0
    %217 = vmatmul.mubr.f32.gmra.mrb[0].mxu0 %v147
    %v218 = vpop.f32.mrb[0].mxu0
    %v219 = vadd.f32 %v144, %v218
    %v220 = vpop.f32.mrb[0].mxu0
    %221 = vdwg.mxu0
    %222 = vst [vmem:[#allocation5] sm:$0x1f] %v219
    // Predicated region
    $region26: #{tpu_custom_call.1} parent=1 // pred_check
      _
    $region27: #{tpu_custom_call.1} parent=1 // pred_check_branch
      %224 = sbr.rel (0) target = $region29
    $region28: #{tpu_custom_call.1} parent=1 // pred_region
      %s226 = ssub.s32 128, 128
      %227 = vsyncadd [#allocation4], %s226
      %s229 = sshll.u32 [#allocation5], 4
      %s230 = int_to_ptr.vmem [resolvable:$true] %s229
      %232 = dma.vmem_to_hbm [thread:$0]  %s230, 128, %s5, [#allocation4]
    $region29: #{tpu_custom_call.1} parent=1 // pred_fallthru
      _
    // Predicated region
    $region30: #{tpu_custom_call.1} parent=1 // pred_check
      _
    $region31: #{tpu_custom_call.1} parent=1 // pred_check_branch
      %234 = sbr.rel (0) target = $region33
    $region32: #{tpu_custom_call.1} parent=1 // pred_region
      %235 = dma.done [#allocation4], 128
    $region33: #{tpu_custom_call.1} parent=1 // pred_fallthru
      _
    %236 = vsyncpa [#allocation3], 1
    %237 = vsyncpa [#allocation4], 1

</llo_original>
